<compile_context>
chip_gen: v5e
topology: v5e:2x2
jax: 0.10.0
libtpu: 0.0.40
codegen_flags: <defaults>
</compile_context>

<pallas_src>
import functools

import jax
import jax.numpy as jnp
from jax.experimental import pallas as pl
from jax.experimental.pallas import tpu as pltpu


def _residual_block_kernel(x_ref, w1_ref, b1_ref, w2_ref, b2_ref, o_ref, *, R, L):
    """One batch element per grid step; fully lane-dense layout.

    x_ref  : (1, R, L) f32  input; each lane-row packs P image rows of W*C values
    w1_ref : (3, L, L) bf16 conv1 banded block-Toeplitz mats (above/same/below)
    b1_ref : (1, L)    f32  conv1 bias tiled along the lane axis
    w2_ref : (3, L, L) bf16 conv2 banded block-Toeplitz mats
    b2_ref : (1, L)    f32  conv2 bias tiled along the lane axis
    o_ref  : (1, R, L)      output block
    """
    f32 = jnp.float32
    bf16 = jnp.bfloat16

    # Masks for the H-direction SAME padding: the first (last) lane-row has no
    # image rows above (below) it, so the wrapped-around roll row is zeroed.
    row = jax.lax.broadcasted_iota(jnp.int32, (R, L), 0)
    top = row == 0
    bot = row == R - 1

    x = x_ref[0]                       # (R, L) f32, kept live for the residual

    def conv3x3(act_bf, w_ref, b_ref):
        # Band_{-1}: input lane-row r contributes to output lane-row r+1.
        # Band_{0} : input lane-row r contributes to output lane-row r.
        # Band_{+1}: input lane-row r contributes to output lane-row r-1.
        p_abv = jnp.dot(act_bf, w_ref[0], preferred_element_type=f32)
        p_mid = jnp.dot(act_bf, w_ref[1], preferred_element_type=f32)
        p_blw = jnp.dot(act_bf, w_ref[2], preferred_element_type=f32)
        acc = p_mid
        # Sublane rotates on the XLU; wrap rows are replaced by the zero padding.
        acc = acc + jnp.where(top, 0.0, pltpu.roll(p_abv, shift=1, axis=0))
        acc = acc + jnp.where(bot, 0.0, pltpu.roll(p_blw, shift=R - 1, axis=0))
        return acc + b_ref[...]        # (R, L) f32

    # Single bf16 cast per conv input; residual stays f32.
    y1 = jnp.maximum(conv3x3(x.astype(bf16), w1_ref, b1_ref), 0.0)
    y2 = conv3x3(y1.astype(bf16), w2_ref, b2_ref)
    o_ref[0] = jnp.maximum(y2 + x, 0.0).astype(o_ref.dtype)


def _conv3x3_band_mats(w_oihw, W, P):
    """PyTorch OIHW 3x3 weights -> (3, P*W*Cin, P*W*Cout) bf16 banded matrices.

    Lane layout: lane = p*(W*C) + w*C + c (P image rows per lane-row).
    mats[0]/mats[1]/mats[2] multiply the lane-row above / the same lane-row /
    the lane-row below the output lane-row.  SAME padding along W is the
    clipped band of shifted identities; SAME padding along H is handled
    in-kernel by masking the rolled-in wrap rows.
    """
    w_hwio = jnp.transpose(w_oihw, (2, 3, 1, 0)).astype(jnp.float32)  # (3,3,Ci,Co)
    Cin, Cout = w_hwio.shape[2], w_hwio.shape[3]

    # Per-ky (W*Cin, W*Cout) banded matrices: output col w reads input col w+dx-1.
    m_ky = []
    for ky in range(3):
        m = jnp.zeros((W * Cin, W * Cout), jnp.float32)
        for dx in range(3):
            m = m + jnp.kron(jnp.eye(W, k=1 - dx, dtype=jnp.float32),
                             w_hwio[ky, dx])
        m_ky.append(m)
    zero = jnp.zeros((W * Cin, W * Cout), jnp.float32)

    bands = []
    for d in (-1, 0, 1):   # input lane-row offset relative to the output lane-row
        blocks = []
        for p_in in range(P):
            brow = []
            for p_out in range(P):
                ky = p_in - p_out + d * P + 1   # kernel tap row (0..2) if in range
                brow.append(m_ky[ky] if 0 <= ky <= 2 else zero)
            blocks.append(brow)
        bands.append(jnp.block(blocks))
    return jnp.stack(bands).astype(jnp.bfloat16)


def residual_block_nhwc(x_nhwc, w1_oihw, b1, w2_oihw, b2):
    """x_nhwc: (B, H, W, C) f32; w*: PyTorch (Cout, Cin, 3, 3); b*: (C,)."""
    B, H, W, C = x_nhwc.shape
    WC = W * C

    # Pack P image rows per 128-wide lane-row when possible (lane-dense I/O);
    # otherwise fall back to one image row per lane-row.
    if WC < 128 and 128 % WC == 0 and H % (128 // WC) == 0:
        P = 128 // WC
    else:
        P = 1
    R, L = H // P, P * WC

    w1m = _conv3x3_band_mats(w1_oihw, W, P)               # (3, L, L) bf16
    w2m = _conv3x3_band_mats(w2_oihw, W, P)
    b1r = jnp.tile(b1.astype(jnp.float32), P * W).reshape(1, L)
    b2r = jnp.tile(b2.astype(jnp.float32), P * W).reshape(1, L)
    x2d = x_nhwc.reshape(B, R, L)                         # pure relabeling of bytes

    kernel = functools.partial(_residual_block_kernel, R=R, L=L)

    out = pl.pallas_call(
        kernel,
        out_shape=jax.ShapeDtypeStruct((B, R, L), x_nhwc.dtype),
        grid_spec=pltpu.PrefetchScalarGridSpec(
            num_scalar_prefetch=0,
            grid=(B,),
            in_specs=[
                pl.BlockSpec((1, R, L), lambda b: (b, 0, 0)),
                pl.BlockSpec((3, L, L), lambda b: (0, 0, 0)),
                pl.BlockSpec((1, L), lambda b: (0, 0)),
                pl.BlockSpec((3, L, L), lambda b: (0, 0, 0)),
                pl.BlockSpec((1, L), lambda b: (0, 0)),
            ],
            out_specs=pl.BlockSpec((1, R, L), lambda b: (b, 0, 0)),
        ),
        compiler_params=pltpu.CompilerParams(
            dimension_semantics=("parallel",)),
    )(x2d, w1m, b1r, w2m, b2r)

    return out.reshape(B, H, W, C)


def residual_block_nchw(x_nchw, w1_oihw, b1, w2_oihw, b2):
    """PyTorch-convention entry point: x (B, C, H, W) -> (B, C, H, W)."""
    x_nhwc = jnp.transpose(x_nchw, (0, 2, 3, 1))
    y = residual_block_nhwc(x_nhwc, w1_oihw, b1, w2_oihw, b2)
    return jnp.transpose(y, (0, 3, 1, 2))


def _reference_nhwc(x_nhwc, w1_oihw, b1, w2_oihw, b2):
    """Pure-JAX f32 reference (lax conv) for correctness checking."""
    dn = ('NHWC', 'HWIO', 'NHWC')
    w1 = jnp.transpose(w1_oihw, (2, 3, 1, 0))
    w2 = jnp.transpose(w2_oihw, (2, 3, 1, 0))
    y = jax.lax.conv_general_dilated(x_nhwc, w1, (1, 1), 'SAME',
                                     dimension_numbers=dn) + b1
    y = jnp.maximum(y, 0.0)
    y = jax.lax.conv_general_dilated(y, w2, (1, 1), 'SAME',
                                     dimension_numbers=dn) + b2
    return jnp.maximum(x_nhwc + y, 0.0)


if __name__ == "__main__":
    B, C, H, W = 2, 4, 16, 16

    key = jax.random.PRNGKey(0)
    kx, kw1, kb1, kw2, kb2 = jax.random.split(key, 5)

    # PyTorch Conv2d parameter shapes: weight (Cout, Cin, 3, 3), bias (C,).
    fan_in = C * 3 * 3
    bound = 1.0 / (fan_in ** 0.5)
    w1 = jax.random.uniform(kw1, (C, C, 3, 3), jnp.float32, -bound, bound)
    b1 = jax.random.uniform(kb1, (C,), jnp.float32, -bound, bound)
    w2 = jax.random.uniform(kw2, (C, C, 3, 3), jnp.float32, -bound, bound)
    b2 = jax.random.uniform(kb2, (C,), jnp.float32, -bound, bound)

    x_nchw = jax.random.normal(kx, (B, C, H, W), jnp.float32)

    out = residual_block_nchw(x_nchw, w1, b1, w2, b2)
    out = jax.block_until_ready(out)

    # Correctness check against a pure-JAX f32 reference (kernel uses bf16 MXU
    # operands with f32 accumulation, so tolerance is loosened accordingly).
    x_nhwc = jnp.transpose(x_nchw, (0, 2, 3, 1))
    ref = jnp.transpose(_reference_nhwc(x_nhwc, w1, b1, w2, b2), (0, 3, 1, 2))
    assert out.shape == (B, C, H, W)
    assert jnp.allclose(out, ref, atol=2e-2, rtol=2e-2), "mismatch vs reference"

    print("KERNEL_OK")
</pallas_src>

<mosaic_0001>
module attributes {stable_mosaic.version = 11 : i64} {
  func.func @_residual_block_kernel(%arg0: i32, %arg1: memref<1x8x128xf32, #tpu.memory_space<vmem>>, %arg2: memref<3x128x128xbf16, #tpu.memory_space<vmem>>, %arg3: memref<1x128xf32, #tpu.memory_space<vmem>>, %arg4: memref<3x128x128xbf16, #tpu.memory_space<vmem>>, %arg5: memref<1x128xf32, #tpu.memory_space<vmem>>, %arg6: memref<1x8x128xf32, #tpu.memory_space<vmem>>) attributes {dimension_semantics = [#tpu.dimension_semantics<parallel>], iteration_bounds = array<i64: 2>, scalar_prefetch = 0 : i64, scratch_operands = 0 : i64, tpu.core_type = #tpu.core_type<tc>, window_params = [{transform_indices = @transform_0, window_bounds = array<i64: 1, 8, 128>}, {pipeline_mode = #tpu.pipeline_mode<synchronous>, transform_indices = @transform_1, window_bounds = array<i64: 3, 128, 128>}, {pipeline_mode = #tpu.pipeline_mode<synchronous>, transform_indices = @transform_2, window_bounds = array<i64: 1, 128>}, {pipeline_mode = #tpu.pipeline_mode<synchronous>, transform_indices = @transform_3, window_bounds = array<i64: 3, 128, 128>}, {pipeline_mode = #tpu.pipeline_mode<synchronous>, transform_indices = @transform_4, window_bounds = array<i64: 1, 128>}, {transform_indices = @transform_5, window_bounds = array<i64: 1, 8, 128>}]} {
    %0 = tpu.iota {dimensions = array<i32: 0>} : vector<8x128xi32>
    %c0_i32 = arith.constant 0 : i32
    %1 = vector.broadcast %c0_i32 : i32 to vector<8x128xi32>
    %2 = arith.cmpi eq, %0, %1 : vector<8x128xi32>
    %c7_i32 = arith.constant 7 : i32
    %3 = vector.broadcast %c7_i32 : i32 to vector<8x128xi32>
    %4 = arith.cmpi eq, %0, %3 : vector<8x128xi32>
    %c0 = arith.constant 0 : index
    %c0_0 = arith.constant 0 : index
    %c0_1 = arith.constant 0 : index
    %5 = vector.load %arg1[%c0, %c0_0, %c0_1] : memref<1x8x128xf32, #tpu.memory_space<vmem>>, vector<1x8x128xf32>
    %6 = vector.shape_cast %5 : vector<1x8x128xf32> to vector<8x128xf32>
    %7 = arith.truncf %6 : vector<8x128xf32> to vector<8x128xbf16>
    %c0_2 = arith.constant 0 : index
    %c0_3 = arith.constant 0 : index
    %c0_4 = arith.constant 0 : index
    %8 = vector.load %arg2[%c0_2, %c0_3, %c0_4] : memref<3x128x128xbf16, #tpu.memory_space<vmem>>, vector<1x128x128xbf16>
    %9 = vector.shape_cast %8 : vector<1x128x128xbf16> to vector<128x128xbf16>
    %cst = arith.constant dense<0.000000e+00> : vector<8x128xf32>
    %10 = tpu.matmul %7, %9, %cst {dimension_numbers = #tpu.dot_dimension_numbers<[1], [0], [0], [1], [0, 0, 1, 1], [], []>} : vector<8x128xbf16>, vector<128x128xbf16>, vector<8x128xf32> -> vector<8x128xf32>
    %c1 = arith.constant 1 : index
    %c0_5 = arith.constant 0 : index
    %c0_6 = arith.constant 0 : index
    %11 = vector.load %arg2[%c1, %c0_5, %c0_6] : memref<3x128x128xbf16, #tpu.memory_space<vmem>>, vector<1x128x128xbf16>
    %12 = vector.shape_cast %11 : vector<1x128x128xbf16> to vector<128x128xbf16>
    %cst_7 = arith.constant dense<0.000000e+00> : vector<8x128xf32>
    %13 = tpu.matmul %7, %12, %cst_7 {dimension_numbers = #tpu.dot_dimension_numbers<[1], [0], [0], [1], [0, 0, 1, 1], [], []>} : vector<8x128xbf16>, vector<128x128xbf16>, vector<8x128xf32> -> vector<8x128xf32>
    %c2 = arith.constant 2 : index
    %c0_8 = arith.constant 0 : index
    %c0_9 = arith.constant 0 : index
    %14 = vector.load %arg2[%c2, %c0_8, %c0_9] : memref<3x128x128xbf16, #tpu.memory_space<vmem>>, vector<1x128x128xbf16>
    %15 = vector.shape_cast %14 : vector<1x128x128xbf16> to vector<128x128xbf16>
    %cst_10 = arith.constant dense<0.000000e+00> : vector<8x128xf32>
    %16 = tpu.matmul %7, %15, %cst_10 {dimension_numbers = #tpu.dot_dimension_numbers<[1], [0], [0], [1], [0, 0, 1, 1], [], []>} : vector<8x128xbf16>, vector<128x128xbf16>, vector<8x128xf32> -> vector<8x128xf32>
    %c1_i32 = arith.constant 1 : i32
    %17 = tpu.dynamic_rotate %10 by %c1_i32 dim 0 : vector<8x128xf32>, i32 -> vector<8x128xf32>
    %cst_11 = arith.constant 0.000000e+00 : f32
    %18 = vector.broadcast %cst_11 : f32 to vector<8x128xf32>
    %19 = arith.select %2, %18, %17 : vector<8x128xi1>, vector<8x128xf32>
    %20 = arith.addf %13, %19 : vector<8x128xf32>
    %c7_i32_12 = arith.constant 7 : i32
    %21 = tpu.dynamic_rotate %16 by %c7_i32_12 dim 0 : vector<8x128xf32>, i32 -> vector<8x128xf32>
    %cst_13 = arith.constant 0.000000e+00 : f32
    %22 = vector.broadcast %cst_13 : f32 to vector<8x128xf32>
    %23 = arith.select %4, %22, %21 : vector<8x128xi1>, vector<8x128xf32>
    %24 = arith.addf %20, %23 : vector<8x128xf32>
    %c0_14 = arith.constant 0 : index
    %c0_15 = arith.constant 0 : index
    %25 = vector.load %arg3[%c0_14, %c0_15] : memref<1x128xf32, #tpu.memory_space<vmem>>, vector<1x128xf32>
    %26 = vector.broadcast %25 : vector<1x128xf32> to vector<8x128xf32>
    %27 = arith.addf %24, %26 : vector<8x128xf32>
    %cst_16 = arith.constant 0.000000e+00 : f32
    %28 = vector.broadcast %cst_16 : f32 to vector<8x128xf32>
    %29 = arith.maximumf %27, %28 : vector<8x128xf32>
    %30 = arith.truncf %29 : vector<8x128xf32> to vector<8x128xbf16>
    %c0_17 = arith.constant 0 : index
    %c0_18 = arith.constant 0 : index
    %c0_19 = arith.constant 0 : index
    %31 = vector.load %arg4[%c0_17, %c0_18, %c0_19] : memref<3x128x128xbf16, #tpu.memory_space<vmem>>, vector<1x128x128xbf16>
    %32 = vector.shape_cast %31 : vector<1x128x128xbf16> to vector<128x128xbf16>
    %cst_20 = arith.constant dense<0.000000e+00> : vector<8x128xf32>
    %33 = tpu.matmul %30, %32, %cst_20 {dimension_numbers = #tpu.dot_dimension_numbers<[1], [0], [0], [1], [0, 0, 1, 1], [], []>} : vector<8x128xbf16>, vector<128x128xbf16>, vector<8x128xf32> -> vector<8x128xf32>
    %c1_21 = arith.constant 1 : index
    %c0_22 = arith.constant 0 : index
    %c0_23 = arith.constant 0 : index
    %34 = vector.load %arg4[%c1_21, %c0_22, %c0_23] : memref<3x128x128xbf16, #tpu.memory_space<vmem>>, vector<1x128x128xbf16>
    %35 = vector.shape_cast %34 : vector<1x128x128xbf16> to vector<128x128xbf16>
    %cst_24 = arith.constant dense<0.000000e+00> : vector<8x128xf32>
    %36 = tpu.matmul %30, %35, %cst_24 {dimension_numbers = #tpu.dot_dimension_numbers<[1], [0], [0], [1], [0, 0, 1, 1], [], []>} : vector<8x128xbf16>, vector<128x128xbf16>, vector<8x128xf32> -> vector<8x128xf32>
    %c2_25 = arith.constant 2 : index
    %c0_26 = arith.constant 0 : index
    %c0_27 = arith.constant 0 : index
    %37 = vector.load %arg4[%c2_25, %c0_26, %c0_27] : memref<3x128x128xbf16, #tpu.memory_space<vmem>>, vector<1x128x128xbf16>
    %38 = vector.shape_cast %37 : vector<1x128x128xbf16> to vector<128x128xbf16>
    %cst_28 = arith.constant dense<0.000000e+00> : vector<8x128xf32>
    %39 = tpu.matmul %30, %38, %cst_28 {dimension_numbers = #tpu.dot_dimension_numbers<[1], [0], [0], [1], [0, 0, 1, 1], [], []>} : vector<8x128xbf16>, vector<128x128xbf16>, vector<8x128xf32> -> vector<8x128xf32>
    %c1_i32_29 = arith.constant 1 : i32
    %40 = tpu.dynamic_rotate %33 by %c1_i32_29 dim 0 : vector<8x128xf32>, i32 -> vector<8x128xf32>
    %cst_30 = arith.constant 0.000000e+00 : f32
    %41 = vector.broadcast %cst_30 : f32 to vector<8x128xf32>
    %42 = arith.select %2, %41, %40 : vector<8x128xi1>, vector<8x128xf32>
    %43 = arith.addf %36, %42 : vector<8x128xf32>
    %c7_i32_31 = arith.constant 7 : i32
    %44 = tpu.dynamic_rotate %39 by %c7_i32_31 dim 0 : vector<8x128xf32>, i32 -> vector<8x128xf32>
    %cst_32 = arith.constant 0.000000e+00 : f32
    %45 = vector.broadcast %cst_32 : f32 to vector<8x128xf32>
    %46 = arith.select %4, %45, %44 : vector<8x128xi1>, vector<8x128xf32>
    %47 = arith.addf %43, %46 : vector<8x128xf32>
    %c0_33 = arith.constant 0 : index
    %c0_34 = arith.constant 0 : index
    %48 = vector.load %arg5[%c0_33, %c0_34] : memref<1x128xf32, #tpu.memory_space<vmem>>, vector<1x128xf32>
    %49 = vector.broadcast %48 : vector<1x128xf32> to vector<8x128xf32>
    %50 = arith.addf %47, %49 : vector<8x128xf32>
    %51 = arith.addf %50, %6 : vector<8x128xf32>
    %cst_35 = arith.constant 0.000000e+00 : f32
    %52 = vector.broadcast %cst_35 : f32 to vector<8x128xf32>
    %53 = arith.maximumf %51, %52 : vector<8x128xf32>
    %c0_36 = arith.constant 0 : index
    %c0_37 = arith.constant 0 : index
    %c0_38 = arith.constant 0 : index
    %54 = vector.load %arg6[%c0_36, %c0_37, %c0_38] : memref<1x8x128xf32, #tpu.memory_space<vmem>>, vector<1x8x128xf32>
    %55 = vector.shape_cast %54 : vector<1x8x128xf32> to vector<8x128xf32>
    %56 = vector.shape_cast %53 : vector<8x128xf32> to vector<1x8x128xf32>
    tpu.vector_store %arg6[%c0_36, %c0_37, %c0_38], %56 {strides = array<i32>} : memref<1x8x128xf32, #tpu.memory_space<vmem>>, vector<1x8x128xf32>,
    return
  }
  func.func @transform_0(%arg0: i32) -> (i32, i32, i32) {
    %c0_i32 = arith.constant 0 : i32
    %c0_i32_0 = arith.constant 0 : i32
    %c0_i32_1 = arith.constant 0 : i32
    return %arg0, %c0_i32, %c0_i32_0 : i32, i32, i32
  }
  func.func @transform_1(%arg0: i32) -> (i32, i32, i32) {
    %c0_i32 = arith.constant 0 : i32
    %c0_i32_0 = arith.constant 0 : i32
    %c0_i32_1 = arith.constant 0 : i32
    %c0_i32_2 = arith.constant 0 : i32
    return %c0_i32, %c0_i32_0, %c0_i32_1 : i32, i32, i32
  }
  func.func @transform_2(%arg0: i32) -> (i32, i32) {
    %c0_i32 = arith.constant 0 : i32
    %c0_i32_0 = arith.constant 0 : i32
    %c0_i32_1 = arith.constant 0 : i32
    return %c0_i32, %c0_i32_0 : i32, i32
  }
  func.func @transform_3(%arg0: i32) -> (i32, i32, i32) {
    %c0_i32 = arith.constant 0 : i32
    %c0_i32_0 = arith.constant 0 : i32
    %c0_i32_1 = arith.constant 0 : i32
    %c0_i32_2 = arith.constant 0 : i32
    return %c0_i32, %c0_i32_0, %c0_i32_1 : i32, i32, i32
  }
  func.func @transform_4(%arg0: i32) -> (i32, i32) {
    %c0_i32 = arith.constant 0 : i32
    %c0_i32_0 = arith.constant 0 : i32
    %c0_i32_1 = arith.constant 0 : i32
    return %c0_i32, %c0_i32_0 : i32, i32
  }
  func.func @transform_5(%arg0: i32) -> (i32, i32, i32) {
    %c0_i32 = arith.constant 0 : i32
    %c0_i32_0 = arith.constant 0 : i32
    %c0_i32_1 = arith.constant 0 : i32
    return %arg0, %c0_i32, %c0_i32_0 : i32, i32, i32
  }
}

</mosaic_0001>

<llo_original>
// kernel: tpu_custom_call.1
$region0: #{tpu_custom_call.1}
  #allocation0 [shape = 'u32[]', space=smem, size = 0x4, offset = 0x4, fixed_abs, tag = 'smem constant byte address 0x4 - core index']
  #allocation1 [shape = 'u32[72,128]{1,0:T(1,128)}', space=vmem, size = 0x9000, scoped, tag = 'internal scratch']
  %s0 = inlined_call_operand.hbm [shape: f32[2,8,128], index: 0, kind: input, shape index: {}]
  %s1 = inlined_call_operand.hbm [shape: bf16[3,128,128], index: 1, kind: input, shape index: {}]
  %s2 = inlined_call_operand.vmem [shape: f32[1,128], index: 2, kind: input, shape index: {}]
  %s3 = inlined_call_operand.hbm [shape: bf16[3,128,128], index: 3, kind: input, shape index: {}]
  %s4 = inlined_call_operand.vmem [shape: f32[1,128], index: 4, kind: input, shape index: {}]
  %s5 = inlined_call_operand.hbm [shape: f32[2,8,128], index: 5, kind: output, shape index: {}]
  %s6 = sld [smem:[#allocation0]]
  $region65: #{tpu_custom_call.1} parent=0
    _
  %s8 = ssub.s32 1, %s6
  %s9 = scalar_select 0, %s8, %s6
  $region1: #{tpu_custom_call.1} parent=0
    #allocation2 [shape = 'u8[8192]{0}', space=vmem, size = 0x2000, scoped, tag = 'input window, operand 0']
    #allocation3 [shape = 's32[2]{0}', space=sflag, size = 0x8, scoped, tag = 'scoped memory for tpu_custom_call.1']
    #allocation4 [shape = 's32[2]{0}', space=sflag, size = 0x8, scoped, tag = 'scoped memory for tpu_custom_call.1']
    #allocation5 [shape = 'u8[98304]{0}', space=vmem, size = 0x18000, scoped, tag = 'input window, operand 1, single buffered']
    #allocation6 [shape = 's32[1]{0}', space=sflag, size = 0x4, scoped, tag = 'scoped memory for tpu_custom_call.1']
    #allocation7 [shape = 'u8[98304]{0}', space=vmem, size = 0x18000, scoped, tag = 'input window, operand 3, single buffered']
    #allocation8 [shape = 'u8[8192]{0}', space=vmem, size = 0x2000, scoped, tag = 'output window, operand 0']
    %10 = vsyncpa [#allocation3], 0
    %s11 = scalar_lea.sflag [#allocation3], 1
    %12 = vsyncpa %s11, 0
    %13 = vsyncpa [#allocation6], 0
    %14 = vsyncpa [#allocation4], 0
    %s15 = scalar_lea.sflag [#allocation4], 1
    %16 = vsyncpa %s15, 0
    loop: start=0, step=1, limit=4
    $region2: #{tpu_custom_call.1} parent=1 // loop_pre_header
      _
    $region3: #{tpu_custom_call.1} parent=1 // loop_header
      %s18 = sphi 0, %s22
      %p19 = scmp.ge.s32.totalorder %s18, 4
      %s28 = sphi 0, %s30
      %s31 = sphi 0, %s28
      %s32 = sphi 0, %s31
      %s48 = sphi 0, %s32
      %s52 = sphi 0, %s52
      %s54 = sphi 0, %s52
      %s55 = sphi 0, %s54
      %s69 = sphi 0, %s55
      %s73 = sphi 0, %s73
      %s75 = sphi 0, %s73
      %s76 = sphi 0, %s75
      %s90 = sphi 0, %s76
      %s94 = sphi 0, %s94
      %s96 = sphi 0, %s94
      %s97 = sphi 0, %s96
      %s111 = sphi 0, %s97
      %s115 = sphi 0, %s115
      %s117 = sphi 0, %s115
      %s118 = sphi 0, %s117
      %s132 = sphi 0, %s118
      %s138 = sphi 0, %s140
      %s141 = sphi 0, %s138
      %s142 = sphi 0, %s141
      %s158 = sphi 0, %s142
    $region4: #{tpu_custom_call.1} parent=1 // loop_header_branch
      %21 = sbr.rel (%p19) target = $region8
    $region5: #{tpu_custom_call.1} parent=1 // loop_body
      %s23 = ssub.s32 %s18, 1
      %s24 = ssub.s32 %s18, 2
      %s25 = sadd.s32 %s18, 1
      %s26 = ssub.s32 %s18, %s25
      %p27 = scmp.eq.s32.totalorder %s26, 0
      %s29 = sadd.s32 %s28, 1
      %s30 = scalar_select %p27, %s28, %s29
      %p33 = pneg %p27
      %p34 = scmp.eq.s32.totalorder %s18, 1
      %p35 = por %p33, %p34
      %p36 = scmp.ne.s32.totalorder %s28, %s31
      %p37 = scmp.eq.s32.totalorder %s18, 0
      %p38 = por %p36, %p37
      %p39 = scmp.ne.s32.totalorder %s28, %s31
      %p40 = scmp.eq.s32.totalorder %s23, 1
      %p41 = por %p39, %p40
      %p42 = scmp.ne.s32.totalorder %s31, %s32
      %p43 = scmp.eq.s32.totalorder %s23, 0
      %p44 = por %p42, %p43
      %p45 = scmp.ne.s32.totalorder %s31, %s32
      %p46 = scmp.eq.s32.totalorder %s24, 1
      %p47 = por %p45, %p46
      %p49 = scmp.ne.s32.totalorder %s32, %s48
      %p50 = scmp.eq.s32.totalorder %s24, 0
      %p51 = por %p49, %p50
      %s53 = sadd.s32 %s52, 1
      %p56 = scmp.eq.s32.totalorder %s18, 1
      %p57 = scmp.ne.s32.totalorder %s52, %s54
      %p58 = scmp.eq.s32.totalorder %s18, 0
      %p59 = por %p57, %p58
      %p60 = scmp.ne.s32.totalorder %s52, %s54
      %p61 = scmp.eq.s32.totalorder %s23, 1
      %p62 = por %p60, %p61
      %p63 = scmp.ne.s32.totalorder %s54, %s55
      %p64 = scmp.eq.s32.totalorder %s23, 0
      %p65 = por %p63, %p64
      %p66 = scmp.ne.s32.totalorder %s54, %s55
      %p67 = scmp.eq.s32.totalorder %s24, 1
      %p68 = por %p66, %p67
      %p70 = scmp.ne.s32.totalorder %s55, %s69
      %p71 = scmp.eq.s32.totalorder %s24, 0
      %p72 = por %p70, %p71
      %s74 = sadd.s32 %s73, 1
      %p77 = scmp.eq.s32.totalorder %s18, 1
      %p78 = scmp.ne.s32.totalorder %s73, %s75
      %p79 = scmp.eq.s32.totalorder %s18, 0
      %p80 = por %p78, %p79
      %p81 = scmp.ne.s32.totalorder %s73, %s75
      %p82 = scmp.eq.s32.totalorder %s23, 1
      %p83 = por %p81, %p82
      %p84 = scmp.ne.s32.totalorder %s75, %s76
      %p85 = scmp.eq.s32.totalorder %s23, 0
      %p86 = por %p84, %p85
      %p87 = scmp.ne.s32.totalorder %s75, %s76
      %p88 = scmp.eq.s32.totalorder %s24, 1
      %p89 = por %p87, %p88
      %p91 = scmp.ne.s32.totalorder %s76, %s90
      %p92 = scmp.eq.s32.totalorder %s24, 0
      %p93 = por %p91, %p92
      %s95 = sadd.s32 %s94, 1
      %p98 = scmp.eq.s32.totalorder %s18, 1
      %p99 = scmp.ne.s32.totalorder %s94, %s96
      %p100 = scmp.eq.s32.totalorder %s18, 0
      %p101 = por %p99, %p100
      %p102 = scmp.ne.s32.totalorder %s94, %s96
      %p103 = scmp.eq.s32.totalorder %s23, 1
      %p104 = por %p102, %p103
      %p105 = scmp.ne.s32.totalorder %s96, %s97
      %p106 = scmp.eq.s32.totalorder %s23, 0
      %p107 = por %p105, %p106
      %p108 = scmp.ne.s32.totalorder %s96, %s97
      %p109 = scmp.eq.s32.totalorder %s24, 1
      %p110 = por %p108, %p109
      %p112 = scmp.ne.s32.totalorder %s97, %s111
      %p113 = scmp.eq.s32.totalorder %s24, 0
      %p114 = por %p112, %p113
      %s116 = sadd.s32 %s115, 1
      %p119 = scmp.eq.s32.totalorder %s18, 1
      %p120 = scmp.ne.s32.totalorder %s115, %s117
      %p121 = scmp.eq.s32.totalorder %s18, 0
      %p122 = por %p120, %p121
      %p123 = scmp.ne.s32.totalorder %s115, %s117
      %p124 = scmp.eq.s32.totalorder %s23, 1
      %p125 = por %p123, %p124
      %p126 = scmp.ne.s32.totalorder %s117, %s118
      %p127 = scmp.eq.s32.totalorder %s23, 0
      %p128 = por %p126, %p127
      %p129 = scmp.ne.s32.totalorder %s117, %s118
      %p130 = scmp.eq.s32.totalorder %s24, 1
      %p131 = por %p129, %p130
      %p133 = scmp.ne.s32.totalorder %s118, %s132
      %p134 = scmp.eq.s32.totalorder %s24, 0
      %p135 = por %p133, %p134
      %s136 = ssub.s32 %s18, %s25
      %p137 = scmp.eq.s32.totalorder %s136, 0
      %s139 = sadd.s32 %s138, 1
      %s140 = scalar_select %p137, %s138, %s139
      %p143 = pneg %p137
      %p144 = scmp.eq.s32.totalorder %s18, 1
      %p145 = por %p143, %p144
      %p146 = scmp.ne.s32.totalorder %s138, %s141
      %p147 = scmp.eq.s32.totalorder %s18, 0
      %p148 = por %p146, %p147
      %p149 = scmp.ne.s32.totalorder %s138, %s141
      %p150 = scmp.eq.s32.totalorder %s23, 1
      %p151 = por %p149, %p150
      %p152 = scmp.ne.s32.totalorder %s141, %s142
      %p153 = scmp.eq.s32.totalorder %s23, 0
      %p154 = por %p152, %p153
      %p155 = scmp.ne.s32.totalorder %s141, %s142
      %p156 = scmp.eq.s32.totalorder %s24, 1
      %p157 = por %p155, %p156
      %p159 = scmp.ne.s32.totalorder %s142, %s158
      %p160 = scmp.eq.s32.totalorder %s24, 0
      %p161 = por %p159, %p160
      %p162 = scmp.le.s32.totalorder 1, %s18
      %p163 = scmp.lt.s32.totalorder %s18, 3
      %p164 = pnand %p162, %p163
      %p165 = pneg %p164
      // Predicated region
      $region9: #{tpu_custom_call.1} parent=5 // pred_check
        _
      $region10: #{tpu_custom_call.1} parent=5 // pred_check_branch
        %167 = sbr.rel (%p164) target = $region12
      $region11: #{tpu_custom_call.1} parent=5 // pred_region
        %s168 = ssub.s32 %s18, 1
        // Predicated region
        $region13: #{tpu_custom_call.1} parent=11 // pred_check
          %p169 = pneg %p65
        $region14: #{tpu_custom_call.1} parent=11 // pred_check_branch
          %171 = sbr.rel (%p169) target = $region16
        $region15: #{tpu_custom_call.1} parent=11 // pred_region
          %173 = vsyncadd [#allocation6], 0
          %s174 = sshll.u32 %s1, 4
          %s175 = int_to_ptr.hbm [resolvable:$true] %s174
          %s176 = sshll.u32 [#allocation5], 4
          %s177 = int_to_ptr.vmem [resolvable:$true] %s176
          %182 = dma.hbm_to_vmem [thread:$0]  %s175, 3072, %s177, [#allocation6], 64, 64, 4
        $region16: #{tpu_custom_call.1} parent=11 // pred_fallthru
          _
        // Predicated region
        $region17: #{tpu_custom_call.1} parent=11 // pred_check
          %p183 = pneg %p86
        $region18: #{tpu_custom_call.1} parent=11 // pred_check_branch
          %185 = sbr.rel (%p183) target = $region20
        $region19: #{tpu_custom_call.1} parent=11 // pred_region
          _
        $region20: #{tpu_custom_call.1} parent=11 // pred_fallthru
          _
        // Predicated region
        $region21: #{tpu_custom_call.1} parent=11 // pred_check
          %p186 = pneg %p107
        $region22: #{tpu_custom_call.1} parent=11 // pred_check_branch
          %188 = sbr.rel (%p186) target = $region24
        $region23: #{tpu_custom_call.1} parent=11 // pred_region
          %190 = vsyncadd [#allocation6], 0
          %s191 = sshll.u32 %s3, 4
          %s192 = int_to_ptr.hbm [resolvable:$true] %s191
          %s193 = sshll.u32 [#allocation7], 4
          %s194 = int_to_ptr.vmem [resolvable:$true] %s193
          %199 = dma.hbm_to_vmem [thread:$0]  %s192, 3072, %s194, [#allocation6], 64, 64, 4
        $region24: #{tpu_custom_call.1} parent=11 // pred_fallthru
          _
        // Predicated region
        $region25: #{tpu_custom_call.1} parent=11 // pred_check
          %p200 = pneg %p128
        $region26: #{tpu_custom_call.1} parent=11 // pred_check_branch
          %202 = sbr.rel (%p200) target = $region28
        $region27: #{tpu_custom_call.1} parent=11 // pred_region
          _
        $region28: #{tpu_custom_call.1} parent=11 // pred_fallthru
          _
      $region12: #{tpu_custom_call.1} parent=5 // pred_fallthru
        _
      %p203 = scmp.lt.s32.totalorder %s18, 2
      // Predicated region
      $region29: #{tpu_custom_call.1} parent=5 // pred_check
        %p204 = pneg %p203
      $region30: #{tpu_custom_call.1} parent=5 // pred_check_branch
        %206 = sbr.rel (%p204) target = $region32
      $region31: #{tpu_custom_call.1} parent=5 // pred_region
        // Predicated region
        $region33: #{tpu_custom_call.1} parent=31 // pred_check
          %p207 = pneg %p38
        $region34: #{tpu_custom_call.1} parent=31 // pred_check_branch
          %209 = sbr.rel (%p207) target = $region36
        $region35: #{tpu_custom_call.1} parent=31 // pred_region
          %s210 = sand.u32 %s28, 1
          %s211 = scalar_lea.sflag [#allocation3], %s210
          %s212 = sand.u32 %s28, 1
          %s213 = smul.addr %s212, 8
          %s214 = scalar_lea.vmem [#allocation2], %s213
          %216 = vsyncadd %s211, 0
          %s217 = smul.addr %s18, 8
          %s218 = scalar_lea.hbm %s0, %s217
          %s220 = sshll.u32 %s218, 4
          %s221 = int_to_ptr.hbm [resolvable:$true] %s220
          %s222 = sshll.u32 %s214, 4
          %s223 = int_to_ptr.vmem [resolvable:$true] %s222
          %225 = dma.hbm_to_vmem [thread:$0]  %s221, 128, %s223, %s211
        $region36: #{tpu_custom_call.1} parent=31 // pred_fallthru
          _
      $region32: #{tpu_custom_call.1} parent=5 // pred_fallthru
        _
      %p226 = scmp.le.s32.totalorder 1, %s18
      %p227 = scmp.lt.s32.totalorder %s18, 3
      %p228 = pnand %p226, %p227
      %p229 = pneg %p228
      // Predicated region
      $region37: #{tpu_custom_call.1} parent=5 // pred_check
        _
      $region38: #{tpu_custom_call.1} parent=5 // pred_check_branch
        %231 = sbr.rel (%p228) target = $region40
      $region39: #{tpu_custom_call.1} parent=5 // pred_region
        %s232 = ssub.s32 %s18, 1
        %s233 = sand.u32 %s31, 1
        %s234 = scalar_lea.sflag [#allocation3], %s233
        %s235 = sand.u32 %s31, 1
        %s236 = smul.addr %s235, 8
        %s237 = scalar_lea.vmem [#allocation2], %s236
        // Predicated region
        $region41: #{tpu_custom_call.1} parent=39 // pred_check
          %p238 = pneg %p44
        $region42: #{tpu_custom_call.1} parent=39 // pred_check_branch
          %240 = sbr.rel (%p238) target = $region44
        $region43: #{tpu_custom_call.1} parent=39 // pred_region
          %242 = dma.done %s234, 128
        $region44: #{tpu_custom_call.1} parent=39 // pred_fallthru
          _
        // Predicated region
        $region45: #{tpu_custom_call.1} parent=39 // pred_check
          %p243 = pneg %p65
        $region46: #{tpu_custom_call.1} parent=39 // pred_check_branch
          %245 = sbr.rel (%p243) target = $region48
        $region47: #{tpu_custom_call.1} parent=39 // pred_region
          %247 = dma.done [#allocation6], 3072
        $region48: #{tpu_custom_call.1} parent=39 // pred_fallthru
          _
        // Predicated region
        $region49: #{tpu_custom_call.1} parent=39 // pred_check
          %p248 = pneg %p107
        $region50: #{tpu_custom_call.1} parent=39 // pred_check_branch
          %250 = sbr.rel (%p248) target = $region52
        $region51: #{tpu_custom_call.1} parent=39 // pred_region
          %252 = dma.done [#allocation6], 3072
        $region52: #{tpu_custom_call.1} parent=39 // pred_fallthru
          _
        %s253 = sand.u32 %s31, 1
        %s254 = scalar_lea.sflag [#allocation3], %s253
        %s255 = sand.u32 %s31, 1
        %s256 = smul.addr %s255, 8
        %s257 = scalar_lea.vmem [#allocation2], %s256
        %p258 = pneg %p44
        %p259 = pneg %p41
        %p260 = pneg %p65
        %p261 = pneg %p62
        %p262 = pneg %p86
        %p263 = pneg %p83
        %p264 = pneg %p107
        %p265 = pneg %p104
        %p266 = pneg %p128
        %p267 = pneg %p125
        %p268 = pneg %p154
        %p269 = pneg %p151
        %s270 = sand.u32 %s141, 1
        %s271 = scalar_lea.sflag [#allocation4], %s270
        %s272 = sand.u32 %s141, 1
        %s273 = smul.addr %s272, 8
        %s274 = scalar_lea.vmem [#allocation8], %s273
        %v275 = vlaneseq
        %v276 = vshrl.u32 %v275, 7
        %vm277 = vcmp.eq.s32.totalorder %v276, 0
        %vm278 = vcmp.eq.s32.totalorder %v276, 7
        %v279 = vld [vmem:[%s237] sm:$0xff]
        %v280 = vpack.c.bf16 %v279, %v279
        %v281 = vld [vmem:[#allocation5] sm:$0xf]
        %v282 = vld [vmem:[#allocation5 + $0x4] sm:$0xf]
        %v283 = vld [vmem:[#allocation5 + $0x8] sm:$0xf]
        %v284 = vld [vmem:[#allocation5 + $0xc] sm:$0xf]
        %v285 = vld [vmem:[#allocation5 + $0x10] sm:$0xf]
        %v286 = vld [vmem:[#allocation5 + $0x14] sm:$0xf]
        %v287 = vld [vmem:[#allocation5 + $0x18] sm:$0xf]
        %v288 = vld [vmem:[#allocation5 + $0x1c] sm:$0xf]
        %v289 = vld [vmem:[#allocation5 + $0x20] sm:$0xf]
        %v290 = vld [vmem:[#allocation5 + $0x24] sm:$0xf]
        %v291 = vld [vmem:[#allocation5 + $0x28] sm:$0xf]
        %v292 = vld [vmem:[#allocation5 + $0x2c] sm:$0xf]
        %v293 = vld [vmem:[#allocation5 + $0x30] sm:$0xf]
        %v294 = vld [vmem:[#allocation5 + $0x34] sm:$0xf]
        %v295 = vld [vmem:[#allocation5 + $0x38] sm:$0xf]
        %v296 = vld [vmem:[#allocation5 + $0x3c] sm:$0xf]
        %v313 = vunpack.c.l.b16 %v281
        %v314 = vunpack.c.l.b16 %v282
        %v315 = vunpack.c.l.b16 %v283
        %v316 = vunpack.c.l.b16 %v284
        %v317 = vunpack.c.l.b16 %v285
        %v318 = vunpack.c.l.b16 %v286
        %v319 = vunpack.c.l.b16 %v287
        %v320 = vunpack.c.l.b16 %v288
        %v321 = vunpack.c.l.b16 %v289
        %v322 = vunpack.c.l.b16 %v290
        %v323 = vunpack.c.l.b16 %v291
        %v324 = vunpack.c.l.b16 %v292
        %v325 = vunpack.c.l.b16 %v293
        %v326 = vunpack.c.l.b16 %v294
        %v327 = vunpack.c.l.b16 %v295
        %v328 = vunpack.c.l.b16 %v296
        %v329 = vpack.c.b16 %v314, %v313
        %v330 = vpack.c.b16 %v316, %v315
        %v331 = vpack.c.b16 %v318, %v317
        %v332 = vpack.c.b16 %v320, %v319
        %v333 = vpack.c.b16 %v322, %v321
        %v334 = vpack.c.b16 %v324, %v323
        %v335 = vpack.c.b16 %v326, %v325
        %v336 = vpack.c.b16 %v328, %v327
        %345 = vmatpush.bf16.msra.mxu0 %v336
        %346 = vmatpush.bf16.msra.mxu0 %v335
        %347 = vmatpush.bf16.msra.mxu0 %v334
        %348 = vmatpush.bf16.msra.mxu0 %v333
        %349 = vmatpush.bf16.msra.mxu0 %v332
        %350 = vmatpush.bf16.msra.mxu0 %v331
        %351 = vmatpush.bf16.msra.mxu0 %v330
        %352 = vmatpush.bf16.msra.mxu0 %v329
        %353 = vmatmul.bf16.gmra.mxu0 %v280
        %v354 = vpop.f32.mrf.mxu0
        %v355 = vadd.f32 0.0, %v354
        %v356 = vpop.f32.mrf.mxu0
        %357 = vdwg.mxu0
        %s358 = scalar_lea.vmem [#allocation5], 64
        %v359 = vld [vmem:[%s358] sm:$0xf]
        %v360 = vld [vmem:[%s358 + $0x4] sm:$0xf]
        %v361 = vld [vmem:[%s358 + $0x8] sm:$0xf]
        %v362 = vld [vmem:[%s358 + $0xc] sm:$0xf]
        %v363 = vld [vmem:[%s358 + $0x10] sm:$0xf]
        %v364 = vld [vmem:[%s358 + $0x14] sm:$0xf]
        %v365 = vld [vmem:[%s358 + $0x18] sm:$0xf]
        %v366 = vld [vmem:[%s358 + $0x1c] sm:$0xf]
        %v367 = vld [vmem:[%s358 + $0x20] sm:$0xf]
        %v368 = vld [vmem:[%s358 + $0x24] sm:$0xf]
        %v369 = vld [vmem:[%s358 + $0x28] sm:$0xf]
        %v370 = vld [vmem:[%s358 + $0x2c] sm:$0xf]
        %v371 = vld [vmem:[%s358 + $0x30] sm:$0xf]
        %v372 = vld [vmem:[%s358 + $0x34] sm:$0xf]
        %v373 = vld [vmem:[%s358 + $0x38] sm:$0xf]
        %v374 = vld [vmem:[%s358 + $0x3c] sm:$0xf]
        %s375 = scalar_lea.vmem [#allocation5], 128
        %v376 = vld [vmem:[%s375] sm:$0xf]
        %v377 = vld [vmem:[%s375 + $0x4] sm:$0xf]
        %v378 = vld [vmem:[%s375 + $0x8] sm:$0xf]
        %v379 = vld [vmem:[%s375 + $0xc] sm:$0xf]
        %v380 = vld [vmem:[%s375 + $0x10] sm:$0xf]
        %v381 = vld [vmem:[%s375 + $0x14] sm:$0xf]
        %v382 = vld [vmem:[%s375 + $0x18] sm:$0xf]
        %v383 = vld [vmem:[%s375 + $0x1c] sm:$0xf]
        %v384 = vld [vmem:[%s375 + $0x20] sm:$0xf]
        %v385 = vld [vmem:[%s375 + $0x24] sm:$0xf]
        %v386 = vld [vmem:[%s375 + $0x28] sm:$0xf]
        %v387 = vld [vmem:[%s375 + $0x2c] sm:$0xf]
        %v388 = vld [vmem:[%s375 + $0x30] sm:$0xf]
        %v389 = vld [vmem:[%s375 + $0x34] sm:$0xf]
        %v390 = vld [vmem:[%s375 + $0x38] sm:$0xf]
        %v391 = vld [vmem:[%s375 + $0x3c] sm:$0xf]
        %v408 = vunpack.c.l.b16 %v376
        %v409 = vunpack.c.l.b16 %v377
        %v410 = vunpack.c.l.b16 %v378
        %v411 = vunpack.c.l.b16 %v379
        %v412 = vunpack.c.l.b16 %v380
        %v413 = vunpack.c.l.b16 %v381
        %v414 = vunpack.c.l.b16 %v382
        %v415 = vunpack.c.l.b16 %v383
        %v416 = vunpack.c.l.b16 %v384
        %v417 = vunpack.c.l.b16 %v385
        %v418 = vunpack.c.l.b16 %v386
        %v419 = vunpack.c.l.b16 %v387
        %v420 = vunpack.c.l.b16 %v388
        %v421 = vunpack.c.l.b16 %v389
        %v422 = vunpack.c.l.b16 %v390
        %v423 = vunpack.c.l.b16 %v391
        %v424 = vpack.c.b16 %v409, %v408
        %v425 = vpack.c.b16 %v411, %v410
        %v426 = vpack.c.b16 %v413, %v412
        %v427 = vpack.c.b16 %v415, %v414
        %v428 = vpack.c.b16 %v417, %v416
        %v429 = vpack.c.b16 %v419, %v418
        %v430 = vpack.c.b16 %v421, %v420
        %v431 = vpack.c.b16 %v423, %v422
        %440 = vmatpush.bf16.msra.mxu0 %v431
        %441 = vmatpush.bf16.msra.mxu0 %v430
        %442 = vmatpush.bf16.msra.mxu0 %v429
        %443 = vmatpush.bf16.msra.mxu0 %v428
        %444 = vmatpush.bf16.msra.mxu0 %v427
        %445 = vmatpush.bf16.msra.mxu0 %v426
        %446 = vmatpush.bf16.msra.mxu0 %v425
        %447 = vmatpush.bf16.msra.mxu0 %v424
        %448 = vmatmul.bf16.gmra.mxu0 %v280
        %v449 = vpop.f32.mrf.mxu0
        %v450 = vadd.f32 0.0, %v449
        %v451 = vpop.f32.mrf.mxu0
        %452 = vdwg.mxu0
        %v453 = vrot.slane %v355, 7
        %v454 = vsel %vm277, 0.0, %v453
        %v471 = vunpack.c.l.b16 %v359
        %v472 = vunpack.c.l.b16 %v360
        %v473 = vunpack.c.l.b16 %v361
        %v474 = vunpack.c.l.b16 %v362
        %v475 = vunpack.c.l.b16 %v363
        %v476 = vunpack.c.l.b16 %v364
        %v477 = vunpack.c.l.b16 %v365
        %v478 = vunpack.c.l.b16 %v366
        %v479 = vunpack.c.l.b16 %v367
        %v480 = vunpack.c.l.b16 %v368
        %v481 = vunpack.c.l.b16 %v369
        %v482 = vunpack.c.l.b16 %v370
        %v483 = vunpack.c.l.b16 %v371
        %v484 = vunpack.c.l.b16 %v372
        %v485 = vunpack.c.l.b16 %v373
        %v486 = vunpack.c.l.b16 %v374
        %v487 = vpack.c.b16 %v472, %v471
        %v488 = vpack.c.b16 %v474, %v473
        %v489 = vpack.c.b16 %v476, %v475
        %v490 = vpack.c.b16 %v478, %v477
        %v491 = vpack.c.b16 %v480, %v479
        %v492 = vpack.c.b16 %v482, %v481
        %v493 = vpack.c.b16 %v484, %v483
        %v494 = vpack.c.b16 %v486, %v485
        %503 = vmatpush.bf16.msra.mxu0 %v494
        %504 = vmatpush.bf16.msra.mxu0 %v493
        %505 = vmatpush.bf16.msra.mxu0 %v492
        %506 = vmatpush.bf16.msra.mxu0 %v491
        %507 = vmatpush.bf16.msra.mxu0 %v490
        %508 = vmatpush.bf16.msra.mxu0 %v489
        %509 = vmatpush.bf16.msra.mxu0 %v488
        %510 = vmatpush.bf16.msra.mxu0 %v487
        %511 = vmatmul.bf16.gmra.mxu0 %v280
        %v512 = vpop.f32.mrf.mxu0
        %v513 = vadd.f32 %v454, %v512
        %v514 = vpop.f32.mrf.mxu0
        %515 = vdwg.mxu0
        %v516 = vrot.slane %v450, 1
        %v517 = vsel %vm278, 0.0, %v516
        %v518 = vadd.f32 %v513, %v517
        %v519 = vld [vmem:[%s2] sm:$0x1]
        %v521 = vperm.slane %v519, 0
        %v523 = vadd.f32 %v518, %v521
        %v524 = vmax.f32 %v523, 0.0
        %v525 = vpack.c.bf16 %v524, %v524
        %v526 = vld [vmem:[#allocation7] sm:$0xf]
        %v527 = vld [vmem:[#allocation7 + $0x4] sm:$0xf]
        %v528 = vld [vmem:[#allocation7 + $0x8] sm:$0xf]
        %v529 = vld [vmem:[#allocation7 + $0xc] sm:$0xf]
        %v530 = vld [vmem:[#allocation7 + $0x10] sm:$0xf]
        %v531 = vld [vmem:[#allocation7 + $0x14] sm:$0xf]
        %v532 = vld [vmem:[#allocation7 + $0x18] sm:$0xf]
        %v533 = vld [vmem:[#allocation7 + $0x1c] sm:$0xf]
        %v534 = vld [vmem:[#allocation7 + $0x20] sm:$0xf]
        %v535 = vld [vmem:[#allocation7 + $0x24] sm:$0xf]
        %v536 = vld [vmem:[#allocation7 + $0x28] sm:$0xf]
        %v537 = vld [vmem:[#allocation7 + $0x2c] sm:$0xf]
        %v538 = vld [vmem:[#allocation7 + $0x30] sm:$0xf]
        %v539 = vld [vmem:[#allocation7 + $0x34] sm:$0xf]
        %v540 = vld [vmem:[#allocation7 + $0x38] sm:$0xf]
        %v541 = vld [vmem:[#allocation7 + $0x3c] sm:$0xf]
        %v558 = vunpack.c.l.b16 %v526
        %v559 = vunpack.c.l.b16 %v527
        %v560 = vunpack.c.l.b16 %v528
        %v561 = vunpack.c.l.b16 %v529
        %v562 = vunpack.c.l.b16 %v530
        %v563 = vunpack.c.l.b16 %v531
        %v564 = vunpack.c.l.b16 %v532
        %v565 = vunpack.c.l.b16 %v533
        %v566 = vunpack.c.l.b16 %v534
        %v567 = vunpack.c.l.b16 %v535
        %v568 = vunpack.c.l.b16 %v536
        %v569 = vunpack.c.l.b16 %v537
        %v570 = vunpack.c.l.b16 %v538
        %v571 = vunpack.c.l.b16 %v539
        %v572 = vunpack.c.l.b16 %v540
        %v573 = vunpack.c.l.b16 %v541
        %v574 = vpack.c.b16 %v559, %v558
        %v575 = vpack.c.b16 %v561, %v560
        %v576 = vpack.c.b16 %v563, %v562
        %v577 = vpack.c.b16 %v565, %v564
        %v578 = vpack.c.b16 %v567, %v566
        %v579 = vpack.c.b16 %v569, %v568
        %v580 = vpack.c.b16 %v571, %v570
        %v581 = vpack.c.b16 %v573, %v572
        %590 = vmatpush.bf16.msra.mxu0 %v581
        %591 = vmatpush.bf16.msra.mxu0 %v580
        %592 = vmatpush.bf16.msra.mxu0 %v579
        %593 = vmatpush.bf16.msra.mxu0 %v578
        %594 = vmatpush.bf16.msra.mxu0 %v577
        %595 = vmatpush.bf16.msra.mxu0 %v576
        %596 = vmatpush.bf16.msra.mxu0 %v575
        %597 = vmatpush.bf16.msra.mxu0 %v574
        %598 = vmatmul.bf16.gmra.mxu0 %v525
        %v599 = vpop.f32.mrf.mxu0
        %v600 = vadd.f32 0.0, %v599
        %v601 = vpop.f32.mrf.mxu0
        %602 = vdwg.mxu0
        %s603 = scalar_lea.vmem [#allocation7], 64
        %v604 = vld [vmem:[%s603] sm:$0xf]
        %v605 = vld [vmem:[%s603 + $0x4] sm:$0xf]
        %v606 = vld [vmem:[%s603 + $0x8] sm:$0xf]
        %v607 = vld [vmem:[%s603 + $0xc] sm:$0xf]
        %v608 = vld [vmem:[%s603 + $0x10] sm:$0xf]
        %v609 = vld [vmem:[%s603 + $0x14] sm:$0xf]
        %v610 = vld [vmem:[%s603 + $0x18] sm:$0xf]
        %v611 = vld [vmem:[%s603 + $0x1c] sm:$0xf]
        %v612 = vld [vmem:[%s603 + $0x20] sm:$0xf]
        %v613 = vld [vmem:[%s603 + $0x24] sm:$0xf]
        %v614 = vld [vmem:[%s603 + $0x28] sm:$0xf]
        %v615 = vld [vmem:[%s603 + $0x2c] sm:$0xf]
        %v616 = vld [vmem:[%s603 + $0x30] sm:$0xf]
        %v617 = vld [vmem:[%s603 + $0x34] sm:$0xf]
        %v618 = vld [vmem:[%s603 + $0x38] sm:$0xf]
        %v619 = vld [vmem:[%s603 + $0x3c] sm:$0xf]
        %s620 = scalar_lea.vmem [#allocation7], 128
        %v621 = vld [vmem:[%s620] sm:$0xf]
        %v622 = vld [vmem:[%s620 + $0x4] sm:$0xf]
        %v623 = vld [vmem:[%s620 + $0x8] sm:$0xf]
        %v624 = vld [vmem:[%s620 + $0xc] sm:$0xf]
        %v625 = vld [vmem:[%s620 + $0x10] sm:$0xf]
        %v626 = vld [vmem:[%s620 + $0x14] sm:$0xf]
        %v627 = vld [vmem:[%s620 + $0x18] sm:$0xf]
        %v628 = vld [vmem:[%s620 + $0x1c] sm:$0xf]
        %v629 = vld [vmem:[%s620 + $0x20] sm:$0xf]
        %v630 = vld [vmem:[%s620 + $0x24] sm:$0xf]
        %v631 = vld [vmem:[%s620 + $0x28] sm:$0xf]
        %v632 = vld [vmem:[%s620 + $0x2c] sm:$0xf]
        %v633 = vld [vmem:[%s620 + $0x30] sm:$0xf]
        %v634 = vld [vmem:[%s620 + $0x34] sm:$0xf]
        %v635 = vld [vmem:[%s620 + $0x38] sm:$0xf]
        %v636 = vld [vmem:[%s620 + $0x3c] sm:$0xf]
        %v653 = vunpack.c.l.b16 %v621
        %v654 = vunpack.c.l.b16 %v622
        %v655 = vunpack.c.l.b16 %v623
        %v656 = vunpack.c.l.b16 %v624
        %v657 = vunpack.c.l.b16 %v625
        %v658 = vunpack.c.l.b16 %v626
        %v659 = vunpack.c.l.b16 %v627
        %v660 = vunpack.c.l.b16 %v628
        %v661 = vunpack.c.l.b16 %v629
        %v662 = vunpack.c.l.b16 %v630
        %v663 = vunpack.c.l.b16 %v631
        %v664 = vunpack.c.l.b16 %v632
        %v665 = vunpack.c.l.b16 %v633
        %v666 = vunpack.c.l.b16 %v634
        %v667 = vunpack.c.l.b16 %v635
        %v668 = vunpack.c.l.b16 %v636
        %v669 = vpack.c.b16 %v654, %v653
        %v670 = vpack.c.b16 %v656, %v655
        %v671 = vpack.c.b16 %v658, %v657
        %v672 = vpack.c.b16 %v660, %v659
        %v673 = vpack.c.b16 %v662, %v661
        %v674 = vpack.c.b16 %v664, %v663
        %v675 = vpack.c.b16 %v666, %v665
        %v676 = vpack.c.b16 %v668, %v667
        %685 = vmatpush.bf16.msra.mxu0 %v676
        %686 = vmatpush.bf16.msra.mxu0 %v675
        %687 = vmatpush.bf16.msra.mxu0 %v674
        %688 = vmatpush.bf16.msra.mxu0 %v673
        %689 = vmatpush.bf16.msra.mxu0 %v672
        %690 = vmatpush.bf16.msra.mxu0 %v671
        %691 = vmatpush.bf16.msra.mxu0 %v670
        %692 = vmatpush.bf16.msra.mxu0 %v669
        %693 = vmatmul.bf16.gmra.mxu0 %v525
        %v694 = vpop.f32.mrf.mxu0
        %v695 = vadd.f32 0.0, %v694
        %v696 = vpop.f32.mrf.mxu0
        %697 = vdwg.mxu0
        %v698 = vrot.slane %v600, 7
        %v699 = vsel %vm277, 0.0, %v698
        %v716 = vunpack.c.l.b16 %v604
        %v717 = vunpack.c.l.b16 %v605
        %v718 = vunpack.c.l.b16 %v606
        %v719 = vunpack.c.l.b16 %v607
        %v720 = vunpack.c.l.b16 %v608
        %v721 = vunpack.c.l.b16 %v609
        %v722 = vunpack.c.l.b16 %v610
        %v723 = vunpack.c.l.b16 %v611
        %v724 = vunpack.c.l.b16 %v612
        %v725 = vunpack.c.l.b16 %v613
        %v726 = vunpack.c.l.b16 %v614
        %v727 = vunpack.c.l.b16 %v615
        %v728 = vunpack.c.l.b16 %v616
        %v729 = vunpack.c.l.b16 %v617
        %v730 = vunpack.c.l.b16 %v618
        %v731 = vunpack.c.l.b16 %v619
        %v732 = vpack.c.b16 %v717, %v716
        %v733 = vpack.c.b16 %v719, %v718
        %v734 = vpack.c.b16 %v721, %v720
        %v735 = vpack.c.b16 %v723, %v722
        %v736 = vpack.c.b16 %v725, %v724
        %v737 = vpack.c.b16 %v727, %v726
        %v738 = vpack.c.b16 %v729, %v728
        %v739 = vpack.c.b16 %v731, %v730
        %748 = vmatpush.bf16.msra.mxu0 %v739
        %749 = vmatpush.bf16.msra.mxu0 %v738
        %750 = vmatpush.bf16.msra.mxu0 %v737
        %751 = vmatpush.bf16.msra.mxu0 %v736
        %752 = vmatpush.bf16.msra.mxu0 %v735
        %753 = vmatpush.bf16.msra.mxu0 %v734
        %754 = vmatpush.bf16.msra.mxu0 %v733
        %755 = vmatpush.bf16.msra.mxu0 %v732
        %756 = vmatmul.bf16.gmra.mxu0 %v525
        %v757 = vpop.f32.mrf.mxu0
        %v758 = vadd.f32 %v699, %v757
        %v759 = vpop.f32.mrf.mxu0
        %760 = vdwg.mxu0
        %v761 = vrot.slane %v695, 1
        %v762 = vsel %vm278, 0.0, %v761
        %v763 = vadd.f32 %v758, %v762
        %v764 = vld [vmem:[%s4] sm:$0x1]
        %v766 = vperm.slane %v764, 0
        %v768 = vadd.f32 %v763, %v766
        %v769 = vadd.f32 %v768, %v279
        %v770 = vmax.f32 %v769, 0.0
        %771 = vst [vmem:[%s274] sm:$0xff] %v770
        %s772 = sand.u32 %s141, 1
        %s773 = scalar_lea.sflag [#allocation4], %s772
        %s774 = sand.u32 %s141, 1
        %s775 = smul.addr %s774, 8
        %s776 = scalar_lea.vmem [#allocation8], %s775
        // Predicated region
        $region53: #{tpu_custom_call.1} parent=39 // pred_check
          %p777 = pneg %p151
        $region54: #{tpu_custom_call.1} parent=39 // pred_check_branch
          %779 = sbr.rel (%p777) target = $region56
        $region55: #{tpu_custom_call.1} parent=39 // pred_region
          %781 = vsyncadd %s773, 0
          %s782 = smul.addr %s23, 8
          %s783 = scalar_lea.hbm %s5, %s782
          %s785 = sshll.u32 %s776, 4
          %s786 = int_to_ptr.vmem [resolvable:$true] %s785
          %s787 = sshll.u32 %s783, 4
          %s788 = int_to_ptr.hbm [resolvable:$true] %s787
          %790 = dma.vmem_to_hbm [thread:$0]  %s786, 128, %s788, %s773
        $region56: #{tpu_custom_call.1} parent=39 // pred_fallthru
          _
      $region40: #{tpu_custom_call.1} parent=5 // pred_fallthru
        _
      %p791 = scmp.le.s32.totalorder 2, %s18
      // Predicated region
      $region57: #{tpu_custom_call.1} parent=5 // pred_check
        %p792 = pneg %p791
      $region58: #{tpu_custom_call.1} parent=5 // pred_check_branch
        %794 = sbr.rel (%p792) target = $region60
      $region59: #{tpu_custom_call.1} parent=5 // pred_region
        %s795 = ssub.s32 %s18, 2
        // Predicated region
        $region61: #{tpu_custom_call.1} parent=59 // pred_check
          %p796 = pneg %p157
        $region62: #{tpu_custom_call.1} parent=59 // pred_check_branch
          %798 = sbr.rel (%p796) target = $region64
        $region63: #{tpu_custom_call.1} parent=59 // pred_region
          %s799 = sand.u32 %s142, 1
          %s800 = scalar_lea.sflag [#allocation4], %s799
          %s801 = sand.u32 %s142, 1
          %s802 = smul.addr %s801, 8
          %s803 = scalar_lea.vmem [#allocation8], %s802
          %805 = dma.done %s800, 128
        $region64: #{tpu_custom_call.1} parent=59 // pred_fallthru
          _
      $region60: #{tpu_custom_call.1} parent=5 // pred_fallthru
        _
    $region6: #{tpu_custom_call.1} parent=1 // loop_footer
      %s22 = sadd.s32 1, %s18
    $region7: #{tpu_custom_call.1} parent=1 // loop_footer_branch
      %17 = sbr.rel target = $region3
    $region8: #{tpu_custom_call.1} parent=1 // loop_exit
      _
    %806 = vsyncpa [#allocation3], 1
    %s807 = scalar_lea.sflag [#allocation3], 1
    %808 = vsyncpa %s807, 1
    %809 = vsyncpa [#allocation6], 1
    %810 = vsyncpa [#allocation4], 1
    %s811 = scalar_lea.sflag [#allocation4], 1
    %812 = vsyncpa %s811, 1

</llo_original>
